<compile_context>
chip_gen: v7x
topology: tpu7x:2x2x1
jax: 0.10.0
libtpu: 0.0.40
codegen_flags: <defaults>
</compile_context>

<pallas_src>
import functools

import jax
import jax.numpy as jnp
import numpy as np
from jax.experimental import pallas as pl
from jax.experimental.pallas import tpu as pltpu


def _round_up(x, m):
    return ((x + m - 1) // m) * m


def _cdiv(a, b):
    return (a + b - 1) // b


def _default_act_dtype():
    """bf16 activations on chips with bf16 VPU/EUP (v6e/v7x); f32 elsewhere."""
    try:
        kind = jax.devices()[0].device_kind.lower()
    except Exception:
        return jnp.float32
    if "v6" in kind or "v7" in kind:
        return jnp.bfloat16
    return jnp.float32


def mmd_kernel(x_ref,
               w1_ref, b1_ref, w2_ref, b2_ref, w3_ref, b3_ref, w4_ref, b4_ref,
               cw2_ref, cb2_ref, cw3_ref, cb3_ref, cw4_ref, cb4_ref,
               out_ref, *, act_dtype):
    def layer(h, w_ref, b_ref, act):
        # bf16 x bf16 MXU matmul with f32 accumulation; bias add in f32;
        # SiLU in act_dtype (bf16 on v6e/v7x to relieve the single EUP slot).
        y = jnp.dot(h.astype(w_ref.dtype), w_ref[...],
                    preferred_element_type=jnp.float32) + b_ref[...]
        if act:
            y = y.astype(act_dtype)
            y = y * jax.nn.sigmoid(y)      # SiLU
        return y

    h = x_ref[...]
    h = layer(h, w1_ref, b1_ref, True)
    h = layer(h, w2_ref, b2_ref, True)
    h = layer(h, w3_ref, b3_ref, True)
    feat = layer(h, w4_ref, b4_ref, False)        # f32 [bm, 32]

    c = layer(feat, cw2_ref, cb2_ref, True)
    c = layer(c, cw3_ref, cb3_ref, True)
    logits = layer(c, cw4_ref, cb4_ref, False)    # f32 [bm, output_dim]

    # Pack [features | logits | zero-pad] into one lane-dense (multiple of 128)
    # slab so the HBM writeback uses unmasked full-lane stores.
    bm = out_ref.shape[0]
    slab = out_ref.shape[1]
    pad = slab - feat.shape[1] - logits.shape[1]
    pieces = [feat.astype(out_ref.dtype), logits.astype(out_ref.dtype)]
    if pad > 0:
        pieces.append(jnp.zeros((bm, pad), out_ref.dtype))
    out_ref[...] = jnp.concatenate(pieces, axis=-1)


def _pick_block_m(batch, target):
    """Multiple-of-8 block_m <= batch; even step count when >1 (v7x megacore)."""
    if batch <= 8:
        return batch, 1                       # single full-array block
    bm = max(8, (min(target, batch) // 8) * 8)
    steps = _cdiv(batch, bm)
    if steps > 1 and steps % 2 == 1:
        steps += 1
        bm = max(8, _round_up(_cdiv(batch, steps), 8))
        steps = _cdiv(batch, bm)
    return bm, steps


def prepare_params(params, param_dtype=jnp.bfloat16):
    """Cast weights to bf16 ONCE (outside the per-call wrapper); biases stay f32.

    params: dict of W [in, out] / b [1, out] float32.  Returns a flat tuple in the
    kernel's argument order.
    """
    out = []
    for wname, bname in [("w1", "b1"), ("w2", "b2"), ("w3", "b3"), ("w4", "b4"),
                         ("cw2", "cb2"), ("cw3", "cb3"), ("cw4", "cb4")]:
        out.append(params[wname].astype(param_dtype))
        out.append(params[bname].astype(jnp.float32))
    return tuple(out)


def mmd_model_forward(x, prepared_params, *, block_m=1024,
                      out_dtype=jnp.bfloat16, act_dtype=None):
    """x: [B, input_dim] float32. prepared_params: tuple from prepare_params().

    Returns (features [B, 32], outputs [B, output_dim]) in float32.
    """
    B, input_dim = x.shape
    param_vals = list(prepared_params)
    feat_dim = param_vals[6].shape[1]        # w4 [64, 32]
    output_dim = param_vals[12].shape[1]     # cw4 [8, output_dim]

    if act_dtype is None:
        act_dtype = _default_act_dtype()

    # Lane-dense output slab covering features + logits.
    slab = _round_up(feat_dim + output_dim, 128)

    block_m, steps = _pick_block_m(B, block_m)

    def full_spec(arr):
        # Whole (tiny) weight/bias tensor resident in VMEM for every grid step.
        return pl.BlockSpec(arr.shape, lambda i: (0, 0))

    grid_spec = pltpu.PrefetchScalarGridSpec(
        num_scalar_prefetch=0,
        grid=(steps,),
        in_specs=[pl.BlockSpec((block_m, input_dim), lambda i: (i, 0))]
                 + [full_spec(p) for p in param_vals],
        out_specs=pl.BlockSpec((block_m, slab), lambda i: (i, 0)),
    )

    # Advisory cost estimate so XLA can schedule neighbors around the kernel.
    weights = param_vals[0::2]
    act_widths = [256, 128, 64, 16, 8]       # SiLU layer output widths
    flops = 2 * B * sum(int(w.shape[0] * w.shape[1]) for w in weights)
    transcendentals = B * sum(act_widths)
    bytes_accessed = int(
        B * input_dim * 4
        + B * slab * np.dtype(out_dtype).itemsize
        + sum(int(p.size) * np.dtype(p.dtype).itemsize for p in param_vals))

    packed = pl.pallas_call(
        functools.partial(mmd_kernel, act_dtype=act_dtype),
        out_shape=jax.ShapeDtypeStruct((B, slab), out_dtype),
        grid_spec=grid_spec,
        compiler_params=pltpu.CompilerParams(
            dimension_semantics=("parallel",)),
        cost_estimate=pl.CostEstimate(
            flops=flops,
            transcendentals=transcendentals,
            bytes_accessed=bytes_accessed),
    )(x, *param_vals)

    feats = packed[:, :feat_dim].astype(jnp.float32)
    outs = packed[:, feat_dim:feat_dim + output_dim].astype(jnp.float32)
    return feats, outs


def init_params(key, input_dim, output_dim):
    """Deterministic synthetic parameters. Weights stored as [in, out], biases [1, out]."""
    dims = [
        ("w1", "b1", input_dim, 256),
        ("w2", "b2", 256, 128),
        ("w3", "b3", 128, 64),
        ("w4", "b4", 64, 32),
        ("cw2", "cb2", 32, 16),
        ("cw3", "cb3", 16, 8),
        ("cw4", "cb4", 8, output_dim),
    ]
    params = {}
    for wname, bname, din, dout in dims:
        key, kw, kb = jax.random.split(key, 3)
        scale = 1.0 / jnp.sqrt(jnp.float32(din))
        params[wname] = jax.random.uniform(kw, (din, dout), jnp.float32, -scale, scale)
        params[bname] = jax.random.uniform(kb, (1, dout), jnp.float32, -scale, scale)
    return params


def mmd_model_reference(x, params):
    """Pure-JAX f32 reference of the PyTorch forward for validation."""
    h = jax.nn.silu(x @ params["w1"] + params["b1"])
    h = jax.nn.silu(h @ params["w2"] + params["b2"])
    h = jax.nn.silu(h @ params["w3"] + params["b3"])
    feat = h @ params["w4"] + params["b4"]
    c = jax.nn.silu(feat @ params["cw2"] + params["cb2"])
    c = jax.nn.silu(c @ params["cw3"] + params["cb3"])
    out = c @ params["cw4"] + params["cb4"]
    return feat, out


# TODO(synk): nn.Dropout(p=0.3) and bn1/bn2 are never invoked in the PyTorch forward,
# so they are intentionally not implemented in the kernel.

if __name__ == "__main__":
    key = jax.random.PRNGKey(0)
    B, input_dim, output_dim = 8, 32, 4

    key, kx = jax.random.split(key)
    x = jax.random.normal(kx, (B, input_dim), jnp.float32)
    params = init_params(key, input_dim, output_dim)
    prepared = prepare_params(params)          # bf16 weight cast happens once, here

    feats, outs = mmd_model_forward(x, prepared)   # block_m clamps to 8 for this demo
    jax.block_until_ready((feats, outs))

    ref_feats, ref_outs = mmd_model_reference(x, params)
    assert feats.shape == (B, 32) and outs.shape == (B, output_dim)
    # bf16 matmul inputs + bf16 output slab (f32 accumulation) -> relaxed tolerance.
    assert jnp.allclose(feats, ref_feats, atol=2e-2, rtol=2e-2)
    assert jnp.allclose(outs, ref_outs, atol=2e-2, rtol=2e-2)
    print("KERNEL_OK")
</pallas_src>

<mosaic_0001>
module attributes {stable_mosaic.version = 11 : i64} {
  func.func @mmd_kernel(%arg0: i32, %arg1: memref<8x32xf32, #tpu.memory_space<vmem>>, %arg2: memref<32x256xbf16, #tpu.memory_space<vmem>>, %arg3: memref<1x256xf32, #tpu.memory_space<vmem>>, %arg4: memref<256x128xbf16, #tpu.memory_space<vmem>>, %arg5: memref<1x128xf32, #tpu.memory_space<vmem>>, %arg6: memref<128x64xbf16, #tpu.memory_space<vmem>>, %arg7: memref<1x64xf32, #tpu.memory_space<vmem>>, %arg8: memref<64x32xbf16, #tpu.memory_space<vmem>>, %arg9: memref<1x32xf32, #tpu.memory_space<vmem>>, %arg10: memref<32x16xbf16, #tpu.memory_space<vmem>>, %arg11: memref<1x16xf32, #tpu.memory_space<vmem>>, %arg12: memref<16x8xbf16, #tpu.memory_space<vmem>>, %arg13: memref<1x8xf32, #tpu.memory_space<vmem>>, %arg14: memref<8x4xbf16, #tpu.memory_space<vmem>>, %arg15: memref<1x4xf32, #tpu.memory_space<vmem>>, %arg16: memref<8x128xbf16, #tpu.memory_space<vmem>>) attributes {dimension_semantics = [#tpu.dimension_semantics<parallel>], iteration_bounds = array<i64: 1>, scalar_prefetch = 0 : i64, scratch_operands = 0 : i64, tpu.core_type = #tpu.core_type<tc>, window_params = [{transform_indices = @transform_0, window_bounds = array<i64: 8, 32>}, {pipeline_mode = #tpu.pipeline_mode<synchronous>, transform_indices = @transform_1, window_bounds = array<i64: 32, 256>}, {pipeline_mode = #tpu.pipeline_mode<synchronous>, transform_indices = @transform_2, window_bounds = array<i64: 1, 256>}, {pipeline_mode = #tpu.pipeline_mode<synchronous>, transform_indices = @transform_3, window_bounds = array<i64: 256, 128>}, {pipeline_mode = #tpu.pipeline_mode<synchronous>, transform_indices = @transform_4, window_bounds = array<i64: 1, 128>}, {pipeline_mode = #tpu.pipeline_mode<synchronous>, transform_indices = @transform_5, window_bounds = array<i64: 128, 64>}, {pipeline_mode = #tpu.pipeline_mode<synchronous>, transform_indices = @transform_6, window_bounds = array<i64: 1, 64>}, {pipeline_mode = #tpu.pipeline_mode<synchronous>, transform_indices = @transform_7, window_bounds = array<i64: 64, 32>}, {pipeline_mode = #tpu.pipeline_mode<synchronous>, transform_indices = @transform_8, window_bounds = array<i64: 1, 32>}, {pipeline_mode = #tpu.pipeline_mode<synchronous>, transform_indices = @transform_9, window_bounds = array<i64: 32, 16>}, {pipeline_mode = #tpu.pipeline_mode<synchronous>, transform_indices = @transform_10, window_bounds = array<i64: 1, 16>}, {pipeline_mode = #tpu.pipeline_mode<synchronous>, transform_indices = @transform_11, window_bounds = array<i64: 16, 8>}, {pipeline_mode = #tpu.pipeline_mode<synchronous>, transform_indices = @transform_12, window_bounds = array<i64: 1, 8>}, {pipeline_mode = #tpu.pipeline_mode<synchronous>, transform_indices = @transform_13, window_bounds = array<i64: 8, 4>}, {pipeline_mode = #tpu.pipeline_mode<synchronous>, transform_indices = @transform_14, window_bounds = array<i64: 1, 4>}, {transform_indices = @transform_15, window_bounds = array<i64: 8, 128>}]} {
    %c0 = arith.constant 0 : index
    %c0_0 = arith.constant 0 : index
    %0 = vector.load %arg1[%c0, %c0_0] : memref<8x32xf32, #tpu.memory_space<vmem>>, vector<8x32xf32>
    %1 = arith.truncf %0 : vector<8x32xf32> to vector<8x32xbf16>
    %c0_1 = arith.constant 0 : index
    %c0_2 = arith.constant 0 : index
    %2 = vector.load %arg2[%c0_1, %c0_2] : memref<32x256xbf16, #tpu.memory_space<vmem>>, vector<32x256xbf16>
    %cst = arith.constant dense<0.000000e+00> : vector<8x256xf32>
    %3 = tpu.matmul %1, %2, %cst {dimension_numbers = #tpu.dot_dimension_numbers<[1], [0], [0], [1], [0, 0, 1, 1], [], []>} : vector<8x32xbf16>, vector<32x256xbf16>, vector<8x256xf32> -> vector<8x256xf32>
    %c0_3 = arith.constant 0 : index
    %c0_4 = arith.constant 0 : index
    %4 = vector.load %arg3[%c0_3, %c0_4] : memref<1x256xf32, #tpu.memory_space<vmem>>, vector<1x256xf32>
    %5 = vector.broadcast %4 : vector<1x256xf32> to vector<8x256xf32>
    %6 = arith.addf %3, %5 : vector<8x256xf32>
    %7 = arith.negf %6 : vector<8x256xf32>
    %8 = math.exp %7 : vector<8x256xf32>
    %cst_5 = arith.constant 1.000000e+00 : f32
    %9 = vector.broadcast %cst_5 : f32 to vector<8x256xf32>
    %10 = arith.addf %9, %8 : vector<8x256xf32>
    %11 = arith.divf %9, %10 : vector<8x256xf32>
    %12 = arith.mulf %6, %11 : vector<8x256xf32>
    %13 = arith.truncf %12 : vector<8x256xf32> to vector<8x256xbf16>
    %c0_6 = arith.constant 0 : index
    %c0_7 = arith.constant 0 : index
    %14 = vector.load %arg4[%c0_6, %c0_7] : memref<256x128xbf16, #tpu.memory_space<vmem>>, vector<256x128xbf16>
    %cst_8 = arith.constant dense<0.000000e+00> : vector<8x128xf32>
    %15 = tpu.matmul %13, %14, %cst_8 {dimension_numbers = #tpu.dot_dimension_numbers<[1], [0], [0], [1], [0, 0, 1, 1], [], []>} : vector<8x256xbf16>, vector<256x128xbf16>, vector<8x128xf32> -> vector<8x128xf32>
    %c0_9 = arith.constant 0 : index
    %c0_10 = arith.constant 0 : index
    %16 = vector.load %arg5[%c0_9, %c0_10] : memref<1x128xf32, #tpu.memory_space<vmem>>, vector<1x128xf32>
    %17 = vector.broadcast %16 : vector<1x128xf32> to vector<8x128xf32>
    %18 = arith.addf %15, %17 : vector<8x128xf32>
    %19 = arith.negf %18 : vector<8x128xf32>
    %20 = math.exp %19 : vector<8x128xf32>
    %cst_11 = arith.constant 1.000000e+00 : f32
    %21 = vector.broadcast %cst_11 : f32 to vector<8x128xf32>
    %22 = arith.addf %21, %20 : vector<8x128xf32>
    %23 = arith.divf %21, %22 : vector<8x128xf32>
    %24 = arith.mulf %18, %23 : vector<8x128xf32>
    %25 = arith.truncf %24 : vector<8x128xf32> to vector<8x128xbf16>
    %c0_12 = arith.constant 0 : index
    %c0_13 = arith.constant 0 : index
    %26 = vector.load %arg6[%c0_12, %c0_13] : memref<128x64xbf16, #tpu.memory_space<vmem>>, vector<128x64xbf16>
    %cst_14 = arith.constant dense<0.000000e+00> : vector<8x64xf32>
    %27 = tpu.matmul %25, %26, %cst_14 {dimension_numbers = #tpu.dot_dimension_numbers<[1], [0], [0], [1], [0, 0, 1, 1], [], []>} : vector<8x128xbf16>, vector<128x64xbf16>, vector<8x64xf32> -> vector<8x64xf32>
    %c0_15 = arith.constant 0 : index
    %c0_16 = arith.constant 0 : index
    %28 = vector.load %arg7[%c0_15, %c0_16] : memref<1x64xf32, #tpu.memory_space<vmem>>, vector<1x64xf32>
    %29 = vector.broadcast %28 : vector<1x64xf32> to vector<8x64xf32>
    %30 = arith.addf %27, %29 : vector<8x64xf32>
    %31 = arith.negf %30 : vector<8x64xf32>
    %32 = math.exp %31 : vector<8x64xf32>
    %cst_17 = arith.constant 1.000000e+00 : f32
    %33 = vector.broadcast %cst_17 : f32 to vector<8x64xf32>
    %34 = arith.addf %33, %32 : vector<8x64xf32>
    %35 = arith.divf %33, %34 : vector<8x64xf32>
    %36 = arith.mulf %30, %35 : vector<8x64xf32>
    %37 = arith.truncf %36 : vector<8x64xf32> to vector<8x64xbf16>
    %c0_18 = arith.constant 0 : index
    %c0_19 = arith.constant 0 : index
    %38 = vector.load %arg8[%c0_18, %c0_19] : memref<64x32xbf16, #tpu.memory_space<vmem>>, vector<64x32xbf16>
    %cst_20 = arith.constant dense<0.000000e+00> : vector<8x32xf32>
    %39 = tpu.matmul %37, %38, %cst_20 {dimension_numbers = #tpu.dot_dimension_numbers<[1], [0], [0], [1], [0, 0, 1, 1], [], []>} : vector<8x64xbf16>, vector<64x32xbf16>, vector<8x32xf32> -> vector<8x32xf32>
    %c0_21 = arith.constant 0 : index
    %c0_22 = arith.constant 0 : index
    %40 = vector.load %arg9[%c0_21, %c0_22] : memref<1x32xf32, #tpu.memory_space<vmem>>, vector<1x32xf32>
    %41 = vector.broadcast %40 : vector<1x32xf32> to vector<8x32xf32>
    %42 = arith.addf %39, %41 : vector<8x32xf32>
    %43 = arith.truncf %42 : vector<8x32xf32> to vector<8x32xbf16>
    %c0_23 = arith.constant 0 : index
    %c0_24 = arith.constant 0 : index
    %44 = vector.load %arg10[%c0_23, %c0_24] : memref<32x16xbf16, #tpu.memory_space<vmem>>, vector<32x16xbf16>
    %cst_25 = arith.constant dense<0.000000e+00> : vector<8x16xf32>
    %45 = tpu.matmul %43, %44, %cst_25 {dimension_numbers = #tpu.dot_dimension_numbers<[1], [0], [0], [1], [0, 0, 1, 1], [], []>} : vector<8x32xbf16>, vector<32x16xbf16>, vector<8x16xf32> -> vector<8x16xf32>
    %c0_26 = arith.constant 0 : index
    %c0_27 = arith.constant 0 : index
    %46 = vector.load %arg11[%c0_26, %c0_27] : memref<1x16xf32, #tpu.memory_space<vmem>>, vector<1x16xf32>
    %47 = vector.broadcast %46 : vector<1x16xf32> to vector<8x16xf32>
    %48 = arith.addf %45, %47 : vector<8x16xf32>
    %49 = arith.negf %48 : vector<8x16xf32>
    %50 = math.exp %49 : vector<8x16xf32>
    %cst_28 = arith.constant 1.000000e+00 : f32
    %51 = vector.broadcast %cst_28 : f32 to vector<8x16xf32>
    %52 = arith.addf %51, %50 : vector<8x16xf32>
    %53 = arith.divf %51, %52 : vector<8x16xf32>
    %54 = arith.mulf %48, %53 : vector<8x16xf32>
    %55 = arith.truncf %54 : vector<8x16xf32> to vector<8x16xbf16>
    %c0_29 = arith.constant 0 : index
    %c0_30 = arith.constant 0 : index
    %56 = vector.load %arg12[%c0_29, %c0_30] : memref<16x8xbf16, #tpu.memory_space<vmem>>, vector<16x8xbf16>
    %cst_31 = arith.constant dense<0.000000e+00> : vector<8x8xf32>
    %57 = tpu.matmul %55, %56, %cst_31 {dimension_numbers = #tpu.dot_dimension_numbers<[1], [0], [0], [1], [0, 0, 1, 1], [], []>} : vector<8x16xbf16>, vector<16x8xbf16>, vector<8x8xf32> -> vector<8x8xf32>
    %c0_32 = arith.constant 0 : index
    %c0_33 = arith.constant 0 : index
    %58 = vector.load %arg13[%c0_32, %c0_33] : memref<1x8xf32, #tpu.memory_space<vmem>>, vector<1x8xf32>
    %59 = vector.broadcast %58 : vector<1x8xf32> to vector<8x8xf32>
    %60 = arith.addf %57, %59 : vector<8x8xf32>
    %61 = arith.negf %60 : vector<8x8xf32>
    %62 = math.exp %61 : vector<8x8xf32>
    %cst_34 = arith.constant 1.000000e+00 : f32
    %63 = vector.broadcast %cst_34 : f32 to vector<8x8xf32>
    %64 = arith.addf %63, %62 : vector<8x8xf32>
    %65 = arith.divf %63, %64 : vector<8x8xf32>
    %66 = arith.mulf %60, %65 : vector<8x8xf32>
    %67 = arith.truncf %66 : vector<8x8xf32> to vector<8x8xbf16>
    %c0_35 = arith.constant 0 : index
    %c0_36 = arith.constant 0 : index
    %68 = vector.load %arg14[%c0_35, %c0_36] : memref<8x4xbf16, #tpu.memory_space<vmem>>, vector<8x4xbf16>
    %cst_37 = arith.constant dense<0.000000e+00> : vector<8x4xf32>
    %69 = tpu.matmul %67, %68, %cst_37 {dimension_numbers = #tpu.dot_dimension_numbers<[1], [0], [0], [1], [0, 0, 1, 1], [], []>} : vector<8x8xbf16>, vector<8x4xbf16>, vector<8x4xf32> -> vector<8x4xf32>
    %c0_38 = arith.constant 0 : index
    %c0_39 = arith.constant 0 : index
    %70 = vector.load %arg15[%c0_38, %c0_39] : memref<1x4xf32, #tpu.memory_space<vmem>>, vector<1x4xf32>
    %71 = vector.broadcast %70 : vector<1x4xf32> to vector<8x4xf32>
    %72 = arith.addf %69, %71 : vector<8x4xf32>
    %73 = arith.truncf %42 : vector<8x32xf32> to vector<8x32xbf16>
    %74 = arith.truncf %72 : vector<8x4xf32> to vector<8x4xbf16>
    %cst_40 = arith.constant 0.000000e+00 : bf16
    %75 = vector.broadcast %cst_40 : bf16 to vector<8x92xbf16>
    %76 = tpu.concatenate %73, %74, %75 in 1 : vector<8x32xbf16>, vector<8x4xbf16>, vector<8x92xbf16> -> vector<8x128xbf16>
    %c0_41 = arith.constant 0 : index
    %c0_42 = arith.constant 0 : index
    %77 = vector.load %arg16[%c0_41, %c0_42] : memref<8x128xbf16, #tpu.memory_space<vmem>>, vector<8x128xbf16>
    tpu.vector_store %arg16[%c0_41, %c0_42], %76 {strides = array<i32>} : memref<8x128xbf16, #tpu.memory_space<vmem>>, vector<8x128xbf16>,
    return
  }
  func.func @transform_0(%arg0: i32) -> (i32, i32) {
    %c0_i32 = arith.constant 0 : i32
    %c0_i32_0 = arith.constant 0 : i32
    return %arg0, %c0_i32 : i32, i32
  }
  func.func @transform_1(%arg0: i32) -> (i32, i32) {
    %c0_i32 = arith.constant 0 : i32
    %c0_i32_0 = arith.constant 0 : i32
    %c0_i32_1 = arith.constant 0 : i32
    return %c0_i32, %c0_i32_0 : i32, i32
  }
  func.func @transform_2(%arg0: i32) -> (i32, i32) {
    %c0_i32 = arith.constant 0 : i32
    %c0_i32_0 = arith.constant 0 : i32
    %c0_i32_1 = arith.constant 0 : i32
    return %c0_i32, %c0_i32_0 : i32, i32
  }
  func.func @transform_3(%arg0: i32) -> (i32, i32) {
    %c0_i32 = arith.constant 0 : i32
    %c0_i32_0 = arith.constant 0 : i32
    %c0_i32_1 = arith.constant 0 : i32
    return %c0_i32, %c0_i32_0 : i32, i32
  }
  func.func @transform_4(%arg0: i32) -> (i32, i32) {
    %c0_i32 = arith.constant 0 : i32
    %c0_i32_0 = arith.constant 0 : i32
    %c0_i32_1 = arith.constant 0 : i32
    return %c0_i32, %c0_i32_0 : i32, i32
  }
  func.func @transform_5(%arg0: i32) -> (i32, i32) {
    %c0_i32 = arith.constant 0 : i32
    %c0_i32_0 = arith.constant 0 : i32
    %c0_i32_1 = arith.constant 0 : i32
    return %c0_i32, %c0_i32_0 : i32, i32
  }
  func.func @transform_6(%arg0: i32) -> (i32, i32) {
    %c0_i32 = arith.constant 0 : i32
    %c0_i32_0 = arith.constant 0 : i32
    %c0_i32_1 = arith.constant 0 : i32
    return %c0_i32, %c0_i32_0 : i32, i32
  }
  func.func @transform_7(%arg0: i32) -> (i32, i32) {
    %c0_i32 = arith.constant 0 : i32
    %c0_i32_0 = arith.constant 0 : i32
    %c0_i32_1 = arith.constant 0 : i32
    return %c0_i32, %c0_i32_0 : i32, i32
  }
  func.func @transform_8(%arg0: i32) -> (i32, i32) {
    %c0_i32 = arith.constant 0 : i32
    %c0_i32_0 = arith.constant 0 : i32
    %c0_i32_1 = arith.constant 0 : i32
    return %c0_i32, %c0_i32_0 : i32, i32
  }
  func.func @transform_9(%arg0: i32) -> (i32, i32) {
    %c0_i32 = arith.constant 0 : i32
    %c0_i32_0 = arith.constant 0 : i32
    %c0_i32_1 = arith.constant 0 : i32
    return %c0_i32, %c0_i32_0 : i32, i32
  }
  func.func @transform_10(%arg0: i32) -> (i32, i32) {
    %c0_i32 = arith.constant 0 : i32
    %c0_i32_0 = arith.constant 0 : i32
    %c0_i32_1 = arith.constant 0 : i32
    return %c0_i32, %c0_i32_0 : i32, i32
  }
  func.func @transform_11(%arg0: i32) -> (i32, i32) {
    %c0_i32 = arith.constant 0 : i32
    %c0_i32_0 = arith.constant 0 : i32
    %c0_i32_1 = arith.constant 0 : i32
    return %c0_i32, %c0_i32_0 : i32, i32
  }
  func.func @transform_12(%arg0: i32) -> (i32, i32) {
    %c0_i32 = arith.constant 0 : i32
    %c0_i32_0 = arith.constant 0 : i32
    %c0_i32_1 = arith.constant 0 : i32
    return %c0_i32, %c0_i32_0 : i32, i32
  }
  func.func @transform_13(%arg0: i32) -> (i32, i32) {
    %c0_i32 = arith.constant 0 : i32
    %c0_i32_0 = arith.constant 0 : i32
    %c0_i32_1 = arith.constant 0 : i32
    return %c0_i32, %c0_i32_0 : i32, i32
  }
  func.func @transform_14(%arg0: i32) -> (i32, i32) {
    %c0_i32 = arith.constant 0 : i32
    %c0_i32_0 = arith.constant 0 : i32
    %c0_i32_1 = arith.constant 0 : i32
    return %c0_i32, %c0_i32_0 : i32, i32
  }
  func.func @transform_15(%arg0: i32) -> (i32, i32) {
    %c0_i32 = arith.constant 0 : i32
    %c0_i32_0 = arith.constant 0 : i32
    return %arg0, %c0_i32 : i32, i32
  }
}

</mosaic_0001>

<llo_original>
// kernel: tpu_custom_call.1
$region0: #{tpu_custom_call.1}
  #allocation0 [shape = 'u32[]', space=smem, size = 0x4, offset = 0x4, fixed_abs, tag = 'smem constant byte address 0x4 - core index']
  #allocation1 [shape = 'u32[144,128]{1,0:T(1,128)}', space=vmem, size = 0x12000, scoped, tag = 'internal scratch']
  %s0 = inlined_call_operand.hbm [shape: f32[8,32], index: 0, kind: input, shape index: {}]
  %s1 = inlined_call_operand.vmem [shape: bf16[32,256], index: 1, kind: input, shape index: {}]
  %s2 = inlined_call_operand.hbm [shape: f32[1,256], index: 2, kind: input, shape index: {}]
  %s3 = inlined_call_operand.vmem [shape: bf16[256,128], index: 3, kind: input, shape index: {}]
  %s4 = inlined_call_operand.hbm [shape: f32[1,128], index: 4, kind: input, shape index: {}]
  %s5 = inlined_call_operand.vmem [shape: bf16[128,64], index: 5, kind: input, shape index: {}]
  %s6 = inlined_call_operand.hbm [shape: f32[1,64], index: 6, kind: input, shape index: {}]
  %s7 = inlined_call_operand.vmem [shape: bf16[64,32], index: 7, kind: input, shape index: {}]
  %s8 = inlined_call_operand.hbm [shape: f32[1,32], index: 8, kind: input, shape index: {}]
  %s9 = inlined_call_operand.vmem [shape: bf16[32,16], index: 9, kind: input, shape index: {}]
  %s10 = inlined_call_operand.vmem [shape: f32[1,16], index: 10, kind: input, shape index: {}]
  %s11 = inlined_call_operand.vmem [shape: bf16[16,8], index: 11, kind: input, shape index: {}]
  %s12 = inlined_call_operand.vmem [shape: f32[1,8], index: 12, kind: input, shape index: {}]
  %s13 = inlined_call_operand.vmem [shape: bf16[8,4], index: 13, kind: input, shape index: {}]
  %s14 = inlined_call_operand.vmem [shape: f32[1,4], index: 14, kind: input, shape index: {}]
  %s15 = inlined_call_operand.hbm [shape: bf16[8,128], index: 15, kind: output, shape index: {}]
  %s16 = sld [smem:[#allocation0]]
  $region90: #{tpu_custom_call.1} parent=0
    _
  %s18 = ssub.s32 1, %s16
  %s19 = scalar_select 0, %s18, %s16
  $region1: #{tpu_custom_call.1} parent=0
    #allocation2 [shape = 'u8[4096]{0}', space=vmem, size = 0x1000, scoped, tag = 'input window, operand 0, single buffered']
    #allocation3 [shape = 's32[1]{0}', space=sflag, size = 0x4, scoped, tag = 'scoped memory for tpu_custom_call.1']
    #allocation4 [shape = 's32[1]{0}', space=sflag, size = 0x4, scoped, tag = 'scoped memory for tpu_custom_call.1']
    #allocation5 [shape = 'u8[1024]{0}', space=vmem, size = 0x400, scoped, tag = 'input window, operand 2, single buffered']
    #allocation6 [shape = 's32[1]{0}', space=sflag, size = 0x4, scoped, tag = 'scoped memory for tpu_custom_call.1']
    #allocation7 [shape = 'u8[512]{0}', space=vmem, size = 0x400, scoped, tag = 'input window, operand 4, single buffered']
    #allocation8 [shape = 'u8[512]{0}', space=vmem, size = 0x400, scoped, tag = 'input window, operand 6, single buffered']
    #allocation9 [shape = 's32[1]{0}', space=sflag, size = 0x4, scoped, tag = 'scoped memory for tpu_custom_call.1']
    #allocation10 [shape = 'u8[512]{0}', space=vmem, size = 0x400, scoped, tag = 'input window, operand 8, single buffered']
    #allocation11 [shape = 'u8[2048]{0}', space=vmem, size = 0x800, scoped, tag = 'output window, operand 0, single buffered']
    %20 = vsyncpa [#allocation3], 0
    %21 = vsyncpa [#allocation6], 0
    %22 = vsyncpa [#allocation9], 0
    %23 = vsyncpa [#allocation4], 0
    // Predicated region
    $region2: #{tpu_custom_call.1} parent=1 // pred_check
      _
    $region3: #{tpu_custom_call.1} parent=1 // pred_check_branch
      %25 = sbr.rel (0) target = $region5
    $region4: #{tpu_custom_call.1} parent=1 // pred_region
      %s27 = ssub.s32 128, 128
      %28 = vsyncadd [#allocation3], %s27
      %s30 = sshll.u32 [#allocation2], 4
      %s31 = int_to_ptr.vmem [resolvable:$true] %s30
      %33 = dma.hbm_to_vmem [thread:$0]  %s0, 128, %s31, [#allocation3]
    $region5: #{tpu_custom_call.1} parent=1 // pred_fallthru
      _
    // Predicated region
    $region6: #{tpu_custom_call.1} parent=1 // pred_check
      _
    $region7: #{tpu_custom_call.1} parent=1 // pred_check_branch
      %35 = sbr.rel (0) target = $region9
    $region8: #{tpu_custom_call.1} parent=1 // pred_region
      _
    $region9: #{tpu_custom_call.1} parent=1 // pred_fallthru
      _
    // Predicated region
    $region10: #{tpu_custom_call.1} parent=1 // pred_check
      _
    $region11: #{tpu_custom_call.1} parent=1 // pred_check_branch
      %37 = sbr.rel (0) target = $region13
    $region12: #{tpu_custom_call.1} parent=1 // pred_region
      %s39 = ssub.s32 32, 32
      %40 = vsyncadd [#allocation6], %s39
      %s42 = sshll.u32 [#allocation5], 4
      %s43 = int_to_ptr.vmem [resolvable:$true] %s42
      %45 = dma.hbm_to_vmem [thread:$0]  %s2, 32, %s43, [#allocation6]
    $region13: #{tpu_custom_call.1} parent=1 // pred_fallthru
      _
    // Predicated region
    $region14: #{tpu_custom_call.1} parent=1 // pred_check
      _
    $region15: #{tpu_custom_call.1} parent=1 // pred_check_branch
      %47 = sbr.rel (0) target = $region17
    $region16: #{tpu_custom_call.1} parent=1 // pred_region
      _
    $region17: #{tpu_custom_call.1} parent=1 // pred_fallthru
      _
    // Predicated region
    $region18: #{tpu_custom_call.1} parent=1 // pred_check
      _
    $region19: #{tpu_custom_call.1} parent=1 // pred_check_branch
      %49 = sbr.rel (0) target = $region21
    $region20: #{tpu_custom_call.1} parent=1 // pred_region
      %s51 = ssub.s32 16, 16
      %52 = vsyncadd [#allocation6], %s51
      %s54 = sshll.u32 [#allocation7], 4
      %s55 = int_to_ptr.vmem [resolvable:$true] %s54
      %57 = dma.hbm_to_vmem [thread:$0]  %s4, 16, %s55, [#allocation6]
    $region21: #{tpu_custom_call.1} parent=1 // pred_fallthru
      _
    // Predicated region
    $region22: #{tpu_custom_call.1} parent=1 // pred_check
      _
    $region23: #{tpu_custom_call.1} parent=1 // pred_check_branch
      %59 = sbr.rel (0) target = $region25
    $region24: #{tpu_custom_call.1} parent=1 // pred_region
      _
    $region25: #{tpu_custom_call.1} parent=1 // pred_fallthru
      _
    // Predicated region
    $region26: #{tpu_custom_call.1} parent=1 // pred_check
      _
    $region27: #{tpu_custom_call.1} parent=1 // pred_check_branch
      %61 = sbr.rel (0) target = $region29
    $region28: #{tpu_custom_call.1} parent=1 // pred_region
      %s63 = ssub.s32 16, 16
      %64 = vsyncadd [#allocation9], %s63
      %s66 = sshll.u32 [#allocation8], 4
      %s67 = int_to_ptr.vmem [resolvable:$true] %s66
      %69 = dma.hbm_to_vmem [thread:$0]  %s6, 16, %s67, [#allocation9]
    $region29: #{tpu_custom_call.1} parent=1 // pred_fallthru
      _
    // Predicated region
    $region30: #{tpu_custom_call.1} parent=1 // pred_check
      _
    $region31: #{tpu_custom_call.1} parent=1 // pred_check_branch
      %71 = sbr.rel (0) target = $region33
    $region32: #{tpu_custom_call.1} parent=1 // pred_region
      _
    $region33: #{tpu_custom_call.1} parent=1 // pred_fallthru
      _
    // Predicated region
    $region34: #{tpu_custom_call.1} parent=1 // pred_check
      _
    $region35: #{tpu_custom_call.1} parent=1 // pred_check_branch
      %73 = sbr.rel (0) target = $region37
    $region36: #{tpu_custom_call.1} parent=1 // pred_region
      %s75 = ssub.s32 16, 16
      %76 = vsyncadd [#allocation9], %s75
      %s78 = sshll.u32 [#allocation10], 4
      %s79 = int_to_ptr.vmem [resolvable:$true] %s78
      %81 = dma.hbm_to_vmem [thread:$0]  %s8, 16, %s79, [#allocation9]
    $region37: #{tpu_custom_call.1} parent=1 // pred_fallthru
      _
    // Predicated region
    $region38: #{tpu_custom_call.1} parent=1 // pred_check
      _
    $region39: #{tpu_custom_call.1} parent=1 // pred_check_branch
      %83 = sbr.rel (0) target = $region41
    $region40: #{tpu_custom_call.1} parent=1 // pred_region
      _
    $region41: #{tpu_custom_call.1} parent=1 // pred_fallthru
      _
    // Predicated region
    $region42: #{tpu_custom_call.1} parent=1 // pred_check
      _
    $region43: #{tpu_custom_call.1} parent=1 // pred_check_branch
      %85 = sbr.rel (0) target = $region45
    $region44: #{tpu_custom_call.1} parent=1 // pred_region
      _
    $region45: #{tpu_custom_call.1} parent=1 // pred_fallthru
      _
    // Predicated region
    $region46: #{tpu_custom_call.1} parent=1 // pred_check
      _
    $region47: #{tpu_custom_call.1} parent=1 // pred_check_branch
      %87 = sbr.rel (0) target = $region49
    $region48: #{tpu_custom_call.1} parent=1 // pred_region
      _
    $region49: #{tpu_custom_call.1} parent=1 // pred_fallthru
      _
    // Predicated region
    $region50: #{tpu_custom_call.1} parent=1 // pred_check
      _
    $region51: #{tpu_custom_call.1} parent=1 // pred_check_branch
      %89 = sbr.rel (0) target = $region53
    $region52: #{tpu_custom_call.1} parent=1 // pred_region
      _
    $region53: #{tpu_custom_call.1} parent=1 // pred_fallthru
      _
    // Predicated region
    $region54: #{tpu_custom_call.1} parent=1 // pred_check
      _
    $region55: #{tpu_custom_call.1} parent=1 // pred_check_branch
      %91 = sbr.rel (0) target = $region57
    $region56: #{tpu_custom_call.1} parent=1 // pred_region
      _
    $region57: #{tpu_custom_call.1} parent=1 // pred_fallthru
      _
    // Predicated region
    $region58: #{tpu_custom_call.1} parent=1 // pred_check
      _
    $region59: #{tpu_custom_call.1} parent=1 // pred_check_branch
      %93 = sbr.rel (0) target = $region61
    $region60: #{tpu_custom_call.1} parent=1 // pred_region
      _
    $region61: #{tpu_custom_call.1} parent=1 // pred_fallthru
      _
    // Predicated region
    $region62: #{tpu_custom_call.1} parent=1 // pred_check
      _
    $region63: #{tpu_custom_call.1} parent=1 // pred_check_branch
      %95 = sbr.rel (0) target = $region65
    $region64: #{tpu_custom_call.1} parent=1 // pred_region
      %96 = dma.done [#allocation3], 128
    $region65: #{tpu_custom_call.1} parent=1 // pred_fallthru
      _
    // Predicated region
    $region66: #{tpu_custom_call.1} parent=1 // pred_check
      _
    $region67: #{tpu_custom_call.1} parent=1 // pred_check_branch
      %98 = sbr.rel (0) target = $region69
    $region68: #{tpu_custom_call.1} parent=1 // pred_region
      %99 = dma.done [#allocation6], 32
    $region69: #{tpu_custom_call.1} parent=1 // pred_fallthru
      _
    // Predicated region
    $region70: #{tpu_custom_call.1} parent=1 // pred_check
      _
    $region71: #{tpu_custom_call.1} parent=1 // pred_check_branch
      %101 = sbr.rel (0) target = $region73
    $region72: #{tpu_custom_call.1} parent=1 // pred_region
      %102 = dma.done [#allocation6], 16
    $region73: #{tpu_custom_call.1} parent=1 // pred_fallthru
      _
    // Predicated region
    $region74: #{tpu_custom_call.1} parent=1 // pred_check
      _
    $region75: #{tpu_custom_call.1} parent=1 // pred_check_branch
      %104 = sbr.rel (0) target = $region77
    $region76: #{tpu_custom_call.1} parent=1 // pred_region
      %105 = dma.done [#allocation9], 16
    $region77: #{tpu_custom_call.1} parent=1 // pred_fallthru
      _
    // Predicated region
    $region78: #{tpu_custom_call.1} parent=1 // pred_check
      _
    $region79: #{tpu_custom_call.1} parent=1 // pred_check_branch
      %107 = sbr.rel (0) target = $region81
    $region80: #{tpu_custom_call.1} parent=1 // pred_region
      %108 = dma.done [#allocation9], 16
    $region81: #{tpu_custom_call.1} parent=1 // pred_fallthru
      _
    %v110 = vld [vmem:[#allocation2] sm:$0xff]
    %v111 = vpack.c.bf16 %v110, %v110
    %v112 = vld [vmem:[%s1] sm:$0xff]
    %v113 = vld [vmem:[%s1 + $0x8] sm:$0xff]
    %v114 = vld [vmem:[%s1 + $0x10] sm:$0xff]
    %v115 = vld [vmem:[%s1 + $0x18] sm:$0xff]
    %v116 = vld [vmem:[#allocation5] sm:$0x3]
    %v118 = vlaneseq
    %v119 = vshrl.u32 %v118, 7
    %v120 = vsub.s32 0, %v119
    %v121 = vrot.slane %v116, %v120
    %v122 = vlaneseq
    %v123 = vshrl.u32 %v122, 7
    %v124 = vsub.s32 1, %v123
    %v125 = vrot.slane %v116, %v124
    %v132 = vunpack.c.l.b16 %v112
    %v133 = vunpack.c.h.b16 %v112
    %v134 = vunpack.c.l.b16 %v113
    %v135 = vunpack.c.h.b16 %v113
    %v136 = vunpack.c.l.b16 %v114
    %v137 = vunpack.c.h.b16 %v114
    %v138 = vunpack.c.l.b16 %v115
    %v139 = vunpack.c.h.b16 %v115
    %v140 = vpack.c.b16 %v134, %v132
    %v141 = vpack.c.b16 %v135, %v133
    %v142 = vpack.c.b16 %v138, %v136
    %v143 = vpack.c.b16 %v139, %v137
    %vm148 = vcmask 261120
    %v150 = vsel %vm148, %v111, 0
    %152 = vmatprep.subr.bf16.mxu0 %v141
    %153 = vmatpush1.bf16.msra.mxu0 %v140
    %154 = vmatprep.subr.bf16.mxu0 %v143
    %155 = vmatpush1.bf16.msra.mxu0 %v142
    %156 = vmatprep.subr.bf16.mxu0 0
    %157 = vmatpush1.bf16.msra.mxu0 0
    %158 = vmatprep.subr.bf16.mxu0 0
    %159 = vmatpush1.bf16.msra.mxu0 0
    %160 = vmatprep.subr.bf16.mxu0 0
    %161 = vmatpush1.bf16.msra.mxu0 0
    %162 = vmatprep.subr.bf16.mxu0 0
    %163 = vmatpush1.bf16.msra.mxu0 0
    %164 = vmatprep.subr.bf16.mxu0 0
    %165 = vmatpush1.bf16.msra.mxu0 0
    %166 = vmatprep.subr.bf16.mxu0 0
    %167 = vmatpush1.bf16.msra.mxu0 0
    %168 = vmatprep.subr.bf16.mxu0 0
    %169 = vmatpush1.bf16.msra.mxu0 0
    %170 = vmatprep.subr.bf16.mxu0 0
    %171 = vmatpush1.bf16.msra.mxu0 0
    %172 = vmatprep.subr.bf16.mxu0 0
    %173 = vmatpush1.bf16.msra.mxu0 0
    %174 = vmatprep.subr.bf16.mxu0 0
    %175 = vmatpush1.bf16.msra.mxu0 0
    %176 = vmatprep.subr.bf16.mxu0 0
    %177 = vmatpush1.bf16.msra.mxu0 0
    %178 = vmatprep.subr.bf16.mxu0 0
    %179 = vmatpush1.bf16.msra.mxu0 0
    %180 = vmatprep.subr.bf16.mxu0 0
    %181 = vmatpush1.bf16.msra.mxu0 0
    %182 = vmatprep.subr.bf16.mxu0 0
    %183 = vmatpush1.bf16.msra.mxu0 0
    %184 = vmatprep.mubr.bf16.mxu0 0
    %185 = vmatmul.mubr.bf16.gmra.mrb[0].mxu0 %v150
    %v186 = vpop.f32.mrb[0].mxu0
    %v187 = vadd.f32 %v121, %v186
    %v188 = vpop.f32.mrb[0].mxu0
    %v189 = vadd.f32 %v125, %v188
    %v190 = vpop.f32.mrb[0].mxu0
    %v191 = vpop.f32.mrb[0].mxu0
    %192 = vdwg.mxu0
    %v193 = vxor.u32 %v187, 2147483648
    %v194 = vxor.u32 %v189, 2147483648
    %v195 = vmul.f32 %v193, 1.442695
    %v196 = vpow.pop %v195
    %v197 = vmul.f32 %v194, 1.442695
    %v198 = vpow.pop %v197
    %v199 = vadd.f32 %v196, 1.0
    %v200 = vadd.f32 %v198, 1.0
    %v201 = vrcp.pop %v199
    %v202 = vmul.f32 1.0, %v201
    %v203 = vrcp.pop %v200
    %v204 = vmul.f32 1.0, %v203
    %v205 = vmul.f32 %v187, %v202
    %v206 = vmul.f32 %v189, %v204
    %v207 = vpack.c.bf16 %v205, %v205
    %v208 = vpack.c.bf16 %v206, %v206
    %v209 = vld [vmem:[%s3] sm:$0xf]
    %v210 = vld [vmem:[%s3 + $0x4] sm:$0xf]
    %v211 = vld [vmem:[%s3 + $0x8] sm:$0xf]
    %v212 = vld [vmem:[%s3 + $0xc] sm:$0xf]
    %v213 = vld [vmem:[%s3 + $0x10] sm:$0xf]
    %v214 = vld [vmem:[%s3 + $0x14] sm:$0xf]
    %v215 = vld [vmem:[%s3 + $0x18] sm:$0xf]
    %v216 = vld [vmem:[%s3 + $0x1c] sm:$0xf]
    %v217 = vld [vmem:[%s3 + $0x20] sm:$0xf]
    %v218 = vld [vmem:[%s3 + $0x24] sm:$0xf]
    %v219 = vld [vmem:[%s3 + $0x28] sm:$0xf]
    %v220 = vld [vmem:[%s3 + $0x2c] sm:$0xf]
    %v221 = vld [vmem:[%s3 + $0x30] sm:$0xf]
    %v222 = vld [vmem:[%s3 + $0x34] sm:$0xf]
    %v223 = vld [vmem:[%s3 + $0x38] sm:$0xf]
    %v224 = vld [vmem:[%s3 + $0x3c] sm:$0xf]
    %v225 = vld [vmem:[%s3 + $0x40] sm:$0xf]
    %v226 = vld [vmem:[%s3 + $0x44] sm:$0xf]
    %v227 = vld [vmem:[%s3 + $0x48] sm:$0xf]
    %v228 = vld [vmem:[%s3 + $0x4c] sm:$0xf]
    %v229 = vld [vmem:[%s3 + $0x50] sm:$0xf]
    %v230 = vld [vmem:[%s3 + $0x54] sm:$0xf]
    %v231 = vld [vmem:[%s3 + $0x58] sm:$0xf]
    %v232 = vld [vmem:[%s3 + $0x5c] sm:$0xf]
    %v233 = vld [vmem:[%s3 + $0x60] sm:$0xf]
    %v234 = vld [vmem:[%s3 + $0x64] sm:$0xf]
    %v235 = vld [vmem:[%s3 + $0x68] sm:$0xf]
    %v236 = vld [vmem:[%s3 + $0x6c] sm:$0xf]
    %v237 = vld [vmem:[%s3 + $0x70] sm:$0xf]
    %v238 = vld [vmem:[%s3 + $0x74] sm:$0xf]
    %v239 = vld [vmem:[%s3 + $0x78] sm:$0xf]
    %v240 = vld [vmem:[%s3 + $0x7c] sm:$0xf]
    %v241 = vld [vmem:[#allocation7] sm:$0x1]
    %v243 = vlaneseq
    %v244 = vshrl.u32 %v243, 7
    %v245 = vsub.s32 0, %v244
    %v246 = vrot.slane %v241, %v245
    %v280 = vunpack.c.l.b16 %v209
    %v281 = vunpack.c.l.b16 %v210
    %v282 = vunpack.c.l.b16 %v211
    %v283 = vunpack.c.l.b16 %v212
    %v284 = vunpack.c.l.b16 %v213
    %v285 = vunpack.c.l.b16 %v214
    %v286 = vunpack.c.l.b16 %v215
    %v287 = vunpack.c.l.b16 %v216
    %v288 = vunpack.c.l.b16 %v217
    %v289 = vunpack.c.l.b16 %v218
    %v290 = vunpack.c.l.b16 %v219
    %v291 = vunpack.c.l.b16 %v220
    %v292 = vunpack.c.l.b16 %v221
    %v293 = vunpack.c.l.b16 %v222
    %v294 = vunpack.c.l.b16 %v223
    %v295 = vunpack.c.l.b16 %v224
    %v296 = vunpack.c.l.b16 %v225
    %v297 = vunpack.c.l.b16 %v226
    %v298 = vunpack.c.l.b16 %v227
    %v299 = vunpack.c.l.b16 %v228
    %v300 = vunpack.c.l.b16 %v229
    %v301 = vunpack.c.l.b16 %v230
    %v302 = vunpack.c.l.b16 %v231
    %v303 = vunpack.c.l.b16 %v232
    %v304 = vunpack.c.l.b16 %v233
    %v305 = vunpack.c.l.b16 %v234
    %v306 = vunpack.c.l.b16 %v235
    %v307 = vunpack.c.l.b16 %v236
    %v308 = vunpack.c.l.b16 %v237
    %v309 = vunpack.c.l.b16 %v238
    %v310 = vunpack.c.l.b16 %v239
    %v311 = vunpack.c.l.b16 %v240
    %v312 = vpack.c.b16 %v281, %v280
    %v313 = vpack.c.b16 %v283, %v282
    %v314 = vpack.c.b16 %v285, %v284
    %v315 = vpack.c.b16 %v287, %v286
    %v316 = vpack.c.b16 %v289, %v288
    %v317 = vpack.c.b16 %v291, %v290
    %v318 = vpack.c.b16 %v293, %v292
    %v319 = vpack.c.b16 %v295, %v294
    %v320 = vpack.c.b16 %v297, %v296
    %v321 = vpack.c.b16 %v299, %v298
    %v322 = vpack.c.b16 %v301, %v300
    %v323 = vpack.c.b16 %v303, %v302
    %v324 = vpack.c.b16 %v305, %v304
    %v325 = vpack.c.b16 %v307, %v306
    %v326 = vpack.c.b16 %v309, %v308
    %v327 = vpack.c.b16 %v311, %v310
    %344 = vmatprep.subr.bf16.mxu0 0
    %345 = vmatpush1.bf16.msra.mxu0 %v312
    %346 = vmatprep.subr.bf16.mxu0 0
    %347 = vmatpush1.bf16.msra.mxu0 %v313
    %348 = vmatprep.subr.bf16.mxu0 0
    %349 = vmatpush1.bf16.msra.mxu0 %v314
    %350 = vmatprep.subr.bf16.mxu0 0
    %351 = vmatpush1.bf16.msra.mxu0 %v315
    %352 = vmatprep.subr.bf16.mxu0 0
    %353 = vmatpush1.bf16.msra.mxu0 %v316
    %354 = vmatprep.subr.bf16.mxu0 0
    %355 = vmatpush1.bf16.msra.mxu0 %v317
    %356 = vmatprep.subr.bf16.mxu0 0
    %357 = vmatpush1.bf16.msra.mxu0 %v318
    %358 = vmatprep.subr.bf16.mxu0 0
    %359 = vmatpush1.bf16.msra.mxu0 %v319
    %360 = vmatprep.subr.bf16.mxu0 0
    %361 = vmatpush1.bf16.msra.mxu0 %v320
    %362 = vmatprep.subr.bf16.mxu0 0
    %363 = vmatpush1.bf16.msra.mxu0 %v321
    %364 = vmatprep.subr.bf16.mxu0 0
    %365 = vmatpush1.bf16.msra.mxu0 %v322
    %366 = vmatprep.subr.bf16.mxu0 0
    %367 = vmatpush1.bf16.msra.mxu0 %v323
    %368 = vmatprep.subr.bf16.mxu0 0
    %369 = vmatpush1.bf16.msra.mxu0 %v324
    %370 = vmatprep.subr.bf16.mxu0 0
    %371 = vmatpush1.bf16.msra.mxu0 %v325
    %372 = vmatprep.subr.bf16.mxu0 0
    %373 = vmatpush1.bf16.msra.mxu0 %v326
    %374 = vmatprep.subr.bf16.mxu0 0
    %375 = vmatpush1.bf16.msra.mxu0 %v327
    %376 = vmatprep.mubr.bf16.mxu0 %v208
    %377 = vmatmul.mubr.bf16.gmra.mrb[0].mxu0 %v207
    %v378 = vpop.f32.mrb[0].mxu0
    %v379 = vadd.f32 %v246, %v378
    %v380 = vpop.f32.mrb[0].mxu0
    %v381 = vpop.f32.mrb[0].mxu0
    %v382 = vpop.f32.mrb[0].mxu0
    %383 = vdwg.mxu0
    %v384 = vxor.u32 %v379, 2147483648
    %v385 = vmul.f32 %v384, 1.442695
    %v386 = vpow.pop %v385
    %v387 = vadd.f32 %v386, 1.0
    %v388 = vrcp.pop %v387
    %v389 = vmul.f32 1.0, %v388
    %v390 = vmul.f32 %v379, %v389
    %v391 = vpack.c.bf16 %v390, %v390
    %v392 = vld [vmem:[%s5] sm:$0xf]
    %v393 = vld [vmem:[%s5 + $0x4] sm:$0xf]
    %v394 = vld [vmem:[%s5 + $0x8] sm:$0xf]
    %v395 = vld [vmem:[%s5 + $0xc] sm:$0xf]
    %v396 = vld [vmem:[%s5 + $0x10] sm:$0xf]
    %v397 = vld [vmem:[%s5 + $0x14] sm:$0xf]
    %v398 = vld [vmem:[%s5 + $0x18] sm:$0xf]
    %v399 = vld [vmem:[%s5 + $0x1c] sm:$0xf]
    %v400 = vld [vmem:[%s5 + $0x20] sm:$0xf]
    %v401 = vld [vmem:[%s5 + $0x24] sm:$0xf]
    %v402 = vld [vmem:[%s5 + $0x28] sm:$0xf]
    %v403 = vld [vmem:[%s5 + $0x2c] sm:$0xf]
    %v404 = vld [vmem:[%s5 + $0x30] sm:$0xf]
    %v405 = vld [vmem:[%s5 + $0x34] sm:$0xf]
    %v406 = vld [vmem:[%s5 + $0x38] sm:$0xf]
    %v407 = vld [vmem:[%s5 + $0x3c] sm:$0xf]
    %v408 = vld [vmem:[#allocation8] sm:$0x1]
    %v410 = vlaneseq
    %v411 = vshrl.u32 %v410, 7
    %v412 = vsub.s32 0, %v411
    %v413 = vrot.slane %v408, %v412
    %v431 = vunpack.c.l.b16 %v392
    %v432 = vunpack.c.l.b16 %v393
    %v433 = vunpack.c.l.b16 %v394
    %v434 = vunpack.c.l.b16 %v395
    %v435 = vunpack.c.l.b16 %v396
    %v436 = vunpack.c.l.b16 %v397
    %v437 = vunpack.c.l.b16 %v398
    %v438 = vunpack.c.l.b16 %v399
    %v439 = vunpack.c.l.b16 %v400
    %v440 = vunpack.c.l.b16 %v401
    %v441 = vunpack.c.l.b16 %v402
    %v442 = vunpack.c.l.b16 %v403
    %v443 = vunpack.c.l.b16 %v404
    %v444 = vunpack.c.l.b16 %v405
    %v445 = vunpack.c.l.b16 %v406
    %v446 = vunpack.c.l.b16 %v407
    %v447 = vpack.c.b16 %v432, %v431
    %v448 = vpack.c.b16 %v434, %v433
    %v449 = vpack.c.b16 %v436, %v435
    %v450 = vpack.c.b16 %v438, %v437
    %v451 = vpack.c.b16 %v440, %v439
    %v452 = vpack.c.b16 %v442, %v441
    %v453 = vpack.c.b16 %v444, %v443
    %v454 = vpack.c.b16 %v446, %v445
    %463 = vmatprep.subr.bf16.mxu0 0
    %464 = vmatpush1.bf16.msra.mxu0 %v447
    %465 = vmatprep.subr.bf16.mxu0 0
    %466 = vmatpush1.bf16.msra.mxu0 %v448
    %467 = vmatprep.subr.bf16.mxu0 0
    %468 = vmatpush1.bf16.msra.mxu0 %v449
    %469 = vmatprep.subr.bf16.mxu0 0
    %470 = vmatpush1.bf16.msra.mxu0 %v450
    %471 = vmatprep.subr.bf16.mxu0 0
    %472 = vmatpush1.bf16.msra.mxu0 %v451
    %473 = vmatprep.subr.bf16.mxu0 0
    %474 = vmatpush1.bf16.msra.mxu0 %v452
    %475 = vmatprep.subr.bf16.mxu0 0
    %476 = vmatpush1.bf16.msra.mxu0 %v453
    %477 = vmatprep.subr.bf16.mxu0 0
    %478 = vmatpush1.bf16.msra.mxu0 %v454
    %479 = vmatprep.subr.bf16.mxu0 0
    %480 = vmatpush1.bf16.msra.mxu0 0
    %481 = vmatprep.subr.bf16.mxu0 0
    %482 = vmatpush1.bf16.msra.mxu0 0
    %483 = vmatprep.subr.bf16.mxu0 0
    %484 = vmatpush1.bf16.msra.mxu0 0
    %485 = vmatprep.subr.bf16.mxu0 0
    %486 = vmatpush1.bf16.msra.mxu0 0
    %487 = vmatprep.subr.bf16.mxu0 0
    %488 = vmatpush1.bf16.msra.mxu0 0
    %489 = vmatprep.subr.bf16.mxu0 0
    %490 = vmatpush1.bf16.msra.mxu0 0
    %491 = vmatprep.subr.bf16.mxu0 0
    %492 = vmatpush1.bf16.msra.mxu0 0
    %493 = vmatprep.subr.bf16.mxu0 0
    %494 = vmatpush1.bf16.msra.mxu0 0
    %495 = vmatprep.mubr.bf16.mxu0 0
    %496 = vmatmul.mubr.bf16.gmra.mrb[0].mxu0 %v391
    %v497 = vpop.f32.mrb[0].mxu0
    %v498 = vadd.f32 %v413, %v497
    %v499 = vpop.f32.mrb[0].mxu0
    %v500 = vpop.f32.mrb[0].mxu0
    %v501 = vpop.f32.mrb[0].mxu0
    %502 = vdwg.mxu0
    %v503 = vxor.u32 %v498, 2147483648
    %v504 = vmul.f32 %v503, 1.442695
    %v505 = vpow.pop %v504
    %v506 = vadd.f32 %v505, 1.0
    %v507 = vrcp.pop %v506
    %v508 = vmul.f32 1.0, %v507
    %v509 = vmul.f32 %v498, %v508
    %v510 = vpack.c.bf16 %v509, %v509
    %v511 = vld [vmem:[%s7] sm:$0xf]
    %v512 = vld [vmem:[%s7 + $0x4] sm:$0xf]
    %v513 = vld [vmem:[%s7 + $0x8] sm:$0xf]
    %v514 = vld [vmem:[%s7 + $0xc] sm:$0xf]
    %v515 = vld [vmem:[%s7 + $0x10] sm:$0xf]
    %v516 = vld [vmem:[%s7 + $0x14] sm:$0xf]
    %v517 = vld [vmem:[%s7 + $0x18] sm:$0xf]
    %v518 = vld [vmem:[%s7 + $0x1c] sm:$0xf]
    %v519 = vld [vmem:[#allocation10] sm:$0x1]
    %v521 = vlaneseq
    %v522 = vshrl.u32 %v521, 7
    %v523 = vsub.s32 0, %v522
    %v524 = vrot.slane %v519, %v523
    %v534 = vunpack.c.l.b16 %v511
    %v535 = vunpack.c.l.b16 %v512
    %v536 = vunpack.c.l.b16 %v513
    %v537 = vunpack.c.l.b16 %v514
    %v538 = vunpack.c.l.b16 %v515
    %v539 = vunpack.c.l.b16 %v516
    %v540 = vunpack.c.l.b16 %v517
    %v541 = vunpack.c.l.b16 %v518
    %v542 = vpack.c.b16 %v535, %v534
    %v543 = vpack.c.b16 %v537, %v536
    %v544 = vpack.c.b16 %v539, %v538
    %v545 = vpack.c.b16 %v541, %v540
    %vm550 = vcmask 523264
    %v552 = vsel %vm550, %v510, 0
    %554 = vmatprep.subr.bf16.mxu0 0
    %555 = vmatpush1.bf16.msra.mxu0 %v542
    %556 = vmatprep.subr.bf16.mxu0 0
    %557 = vmatpush1.bf16.msra.mxu0 %v543
    %558 = vmatprep.subr.bf16.mxu0 0
    %559 = vmatpush1.bf16.msra.mxu0 %v544
    %560 = vmatprep.subr.bf16.mxu0 0
    %561 = vmatpush1.bf16.msra.mxu0 %v545
    %562 = vmatprep.subr.bf16.mxu0 0
    %563 = vmatpush1.bf16.msra.mxu0 0
    %564 = vmatprep.subr.bf16.mxu0 0
    %565 = vmatpush1.bf16.msra.mxu0 0
    %566 = vmatprep.subr.bf16.mxu0 0
    %567 = vmatpush1.bf16.msra.mxu0 0
    %568 = vmatprep.subr.bf16.mxu0 0
    %569 = vmatpush1.bf16.msra.mxu0 0
    %570 = vmatprep.subr.bf16.mxu0 0
    %571 = vmatpush1.bf16.msra.mxu0 0
    %572 = vmatprep.subr.bf16.mxu0 0
    %573 = vmatpush1.bf16.msra.mxu0 0
    %574 = vmatprep.subr.bf16.mxu0 0
    %575 = vmatpush1.bf16.msra.mxu0 0
    %576 = vmatprep.subr.bf16.mxu0 0
    %577 = vmatpush1.bf16.msra.mxu0 0
    %578 = vmatprep.subr.bf16.mxu0 0
    %579 = vmatpush1.bf16.msra.mxu0 0
    %580 = vmatprep.subr.bf16.mxu0 0
    %581 = vmatpush1.bf16.msra.mxu0 0
    %582 = vmatprep.subr.bf16.mxu0 0
    %583 = vmatpush1.bf16.msra.mxu0 0
    %584 = vmatprep.subr.bf16.mxu0 0
    %585 = vmatpush1.bf16.msra.mxu0 0
    %586 = vmatprep.mubr.bf16.mxu0 0
    %587 = vmatmul.mubr.bf16.gmra.mrb[0].mxu0 %v552
    %v588 = vpop.f32.mrb[0].mxu0
    %v589 = vadd.f32 %v524, %v588
    %v590 = vpop.f32.mrb[0].mxu0
    %v591 = vpop.f32.mrb[0].mxu0
    %v592 = vpop.f32.mrb[0].mxu0
    %593 = vdwg.mxu0
    %v594 = vpack.c.bf16 %v589, %v589
    %v595 = vld [vmem:[%s9] sm:$0xf]
    %v596 = vld [vmem:[%s9 + $0x4] sm:$0xf]
    %v597 = vld [vmem:[%s9 + $0x8] sm:$0xf]
    %v598 = vld [vmem:[%s9 + $0xc] sm:$0xf]
    %v599 = vld [vmem:[%s10] sm:$0x1]
    %v601 = vlaneseq
    %v602 = vshrl.u32 %v601, 7
    %v603 = vsub.s32 0, %v602
    %v604 = vrot.slane %v599, %v603
    %v610 = vunpack.c.l.b16 %v595
    %v611 = vunpack.c.l.b16 %v596
    %v612 = vunpack.c.l.b16 %v597
    %v613 = vunpack.c.l.b16 %v598
    %v614 = vpack.c.b16 %v611, %v610
    %v615 = vpack.c.b16 %v613, %v612
    %v619 = vsel %vm148, %v594, 0
    %621 = vmatprep.subr.bf16.mxu0 0
    %622 = vmatpush1.bf16.msra.mxu0 %v614
    %623 = vmatprep.subr.bf16.mxu0 0
    %624 = vmatpush1.bf16.msra.mxu0 %v615
    %625 = vmatprep.subr.bf16.mxu0 0
    %626 = vmatpush1.bf16.msra.mxu0 0
    %627 = vmatprep.subr.bf16.mxu0 0
    %628 = vmatpush1.bf16.msra.mxu0 0
    %629 = vmatprep.subr.bf16.mxu0 0
    %630 = vmatpush1.bf16.msra.mxu0 0
    %631 = vmatprep.subr.bf16.mxu0 0
    %632 = vmatpush1.bf16.msra.mxu0 0
    %633 = vmatprep.subr.bf16.mxu0 0
    %634 = vmatpush1.bf16.msra.mxu0 0
    %635 = vmatprep.subr.bf16.mxu0 0
    %636 = vmatpush1.bf16.msra.mxu0 0
    %637 = vmatprep.subr.bf16.mxu0 0
    %638 = vmatpush1.bf16.msra.mxu0 0
    %639 = vmatprep.subr.bf16.mxu0 0
    %640 = vmatpush1.bf16.msra.mxu0 0
    %641 = vmatprep.subr.bf16.mxu0 0
    %642 = vmatpush1.bf16.msra.mxu0 0
    %643 = vmatprep.subr.bf16.mxu0 0
    %644 = vmatpush1.bf16.msra.mxu0 0
    %645 = vmatprep.subr.bf16.mxu0 0
    %646 = vmatpush1.bf16.msra.mxu0 0
    %647 = vmatprep.subr.bf16.mxu0 0
    %648 = vmatpush1.bf16.msra.mxu0 0
    %649 = vmatprep.subr.bf16.mxu0 0
    %650 = vmatpush1.bf16.msra.mxu0 0
    %651 = vmatprep.subr.bf16.mxu0 0
    %652 = vmatpush1.bf16.msra.mxu0 0
    %653 = vmatprep.mubr.bf16.mxu0 0
    %654 = vmatmul.mubr.bf16.gmra.mrb[0].mxu0 %v619
    %v655 = vpop.f32.mrb[0].mxu0
    %v656 = vadd.f32 %v604, %v655
    %v657 = vpop.f32.mrb[0].mxu0
    %v658 = vpop.f32.mrb[0].mxu0
    %v659 = vpop.f32.mrb[0].mxu0
    %660 = vdwg.mxu0
    %v661 = vxor.u32 %v656, 2147483648
    %v662 = vmul.f32 %v661, 1.442695
    %v663 = vpow.pop %v662
    %v664 = vadd.f32 %v663, 1.0
    %v665 = vrcp.pop %v664
    %v666 = vmul.f32 1.0, %v665
    %v667 = vmul.f32 %v656, %v666
    %v668 = vpack.c.bf16 %v667, %v667
    %v669 = vld [vmem:[%s11] sm:$0xf]
    %v670 = vld [vmem:[%s11 + $0x4] sm:$0xf]
    %v671 = vld [vmem:[%s12] sm:$0x1]
    %v673 = vlaneseq
    %v674 = vshrl.u32 %v673, 7
    %v675 = vsub.s32 0, %v674
    %v676 = vrot.slane %v671, %v675
    %v680 = vunpack.c.l.b16 %v669
    %v681 = vunpack.c.l.b16 %v670
    %v682 = vpack.c.b16 %v681, %v680
    %vm684 = vcmask 130048
    %v686 = vsel %vm684, %v668, 0
    %688 = vmatprep.subr.bf16.mxu0 0
    %689 = vmatpush1.bf16.msra.mxu0 %v682
    %690 = vmatprep.subr.bf16.mxu0 0
    %691 = vmatpush1.bf16.msra.mxu0 0
    %692 = vmatprep.subr.bf16.mxu0 0
    %693 = vmatpush1.bf16.msra.mxu0 0
    %694 = vmatprep.subr.bf16.mxu0 0
    %695 = vmatpush1.bf16.msra.mxu0 0
    %696 = vmatprep.subr.bf16.mxu0 0
    %697 = vmatpush1.bf16.msra.mxu0 0
    %698 = vmatprep.subr.bf16.mxu0 0
    %699 = vmatpush1.bf16.msra.mxu0 0
    %700 = vmatprep.subr.bf16.mxu0 0
    %701 = vmatpush1.bf16.msra.mxu0 0
    %702 = vmatprep.subr.bf16.mxu0 0
    %703 = vmatpush1.bf16.msra.mxu0 0
    %704 = vmatprep.subr.bf16.mxu0 0
    %705 = vmatpush1.bf16.msra.mxu0 0
    %706 = vmatprep.subr.bf16.mxu0 0
    %707 = vmatpush1.bf16.msra.mxu0 0
    %708 = vmatprep.subr.bf16.mxu0 0
    %709 = vmatpush1.bf16.msra.mxu0 0
    %710 = vmatprep.subr.bf16.mxu0 0
    %711 = vmatpush1.bf16.msra.mxu0 0
    %712 = vmatprep.subr.bf16.mxu0 0
    %713 = vmatpush1.bf16.msra.mxu0 0
    %714 = vmatprep.subr.bf16.mxu0 0
    %715 = vmatpush1.bf16.msra.mxu0 0
    %716 = vmatprep.subr.bf16.mxu0 0
    %717 = vmatpush1.bf16.msra.mxu0 0
    %718 = vmatprep.subr.bf16.mxu0 0
    %719 = vmatpush1.bf16.msra.mxu0 0
    %720 = vmatprep.mubr.bf16.mxu0 0
    %721 = vmatmul.mubr.bf16.gmra.mrb[0].mxu0 %v686
    %v722 = vpop.f32.mrb[0].mxu0
    %v723 = vadd.f32 %v676, %v722
    %v724 = vpop.f32.mrb[0].mxu0
    %v725 = vpop.f32.mrb[0].mxu0
    %v726 = vpop.f32.mrb[0].mxu0
    %727 = vdwg.mxu0
    %v728 = vxor.u32 %v723, 2147483648
    %v729 = vmul.f32 %v728, 1.442695
    %v730 = vpow.pop %v729
    %v731 = vadd.f32 %v730, 1.0
    %v732 = vrcp.pop %v731
    %v733 = vmul.f32 1.0, %v732
    %v734 = vmul.f32 %v723, %v733
    %v735 = vpack.c.bf16 %v734, %v734
    %v736 = vld [vmem:[%s13] sm:$0xf]
    %v737 = vld [vmem:[%s14] sm:$0x1]
    %v739 = vlaneseq
    %v740 = vshrl.u32 %v739, 7
    %v741 = vsub.s32 0, %v740
    %v742 = vrot.slane %v737, %v741
    %vm744 = vcmask 64512
    %v746 = vsel %vm744, %v735, 0
    %vm748 = vcmask 1043456
    %v750 = vsel %vm748, %v736, 0
    %752 = vmatprep.subr.bf16.mxu0 0
    %753 = vmatpush1.bf16.msra.mxu0 %v750
    %754 = vmatprep.subr.bf16.mxu0 0
    %755 = vmatpush1.bf16.msra.mxu0 0
    %756 = vmatprep.subr.bf16.mxu0 0
    %757 = vmatpush1.bf16.msra.mxu0 0
    %758 = vmatprep.subr.bf16.mxu0 0
    %759 = vmatpush1.bf16.msra.mxu0 0
    %760 = vmatprep.subr.bf16.mxu0 0
    %761 = vmatpush1.bf16.msra.mxu0 0
    %762 = vmatprep.subr.bf16.mxu0 0
    %763 = vmatpush1.bf16.msra.mxu0 0
    %764 = vmatprep.subr.bf16.mxu0 0
    %765 = vmatpush1.bf16.msra.mxu0 0
    %766 = vmatprep.subr.bf16.mxu0 0
    %767 = vmatpush1.bf16.msra.mxu0 0
    %768 = vmatprep.subr.bf16.mxu0 0
    %769 = vmatpush1.bf16.msra.mxu0 0
    %770 = vmatprep.subr.bf16.mxu0 0
    %771 = vmatpush1.bf16.msra.mxu0 0
    %772 = vmatprep.subr.bf16.mxu0 0
    %773 = vmatpush1.bf16.msra.mxu0 0
    %774 = vmatprep.subr.bf16.mxu0 0
    %775 = vmatpush1.bf16.msra.mxu0 0
    %776 = vmatprep.subr.bf16.mxu0 0
    %777 = vmatpush1.bf16.msra.mxu0 0
    %778 = vmatprep.subr.bf16.mxu0 0
    %779 = vmatpush1.bf16.msra.mxu0 0
    %780 = vmatprep.subr.bf16.mxu0 0
    %781 = vmatpush1.bf16.msra.mxu0 0
    %782 = vmatprep.subr.bf16.mxu0 0
    %783 = vmatpush1.bf16.msra.mxu0 0
    %784 = vmatprep.mubr.bf16.mxu0 0
    %785 = vmatmul.mubr.bf16.gmra.mrb[0].mxu0 %v746
    %v786 = vpop.f32.mrb[0].mxu0
    %v787 = vadd.f32 %v742, %v786
    %v788 = vpop.f32.mrb[0].mxu0
    %v789 = vpop.f32.mrb[0].mxu0
    %v790 = vpop.f32.mrb[0].mxu0
    %791 = vdwg.mxu0
    %v792 = vpack.c.bf16 %v787, %v787
    %794 = vrot.lane.b32.xlu0 %v792, 32
    %v795 = vpop.permute.xlu0 %794
    %v797 = vsel %vm148, %v594, %v795
    %vm798 = vcmask 293888
    %v800 = vsel %vm798, %v797, 0
    %802 = vst [vmem:[#allocation11] sm:$0xf] %v800
    // Predicated region
    $region82: #{tpu_custom_call.1} parent=1 // pred_check
      _
    $region83: #{tpu_custom_call.1} parent=1 // pred_check_branch
      %804 = sbr.rel (0) target = $region85
    $region84: #{tpu_custom_call.1} parent=1 // pred_region
      %s806 = ssub.s32 64, 64
      %807 = vsyncadd [#allocation4], %s806
      %s809 = sshll.u32 [#allocation11], 4
      %s810 = int_to_ptr.vmem [resolvable:$true] %s809
      %812 = dma.vmem_to_hbm [thread:$0]  %s810, 64, %s15, [#allocation4]
    $region85: #{tpu_custom_call.1} parent=1 // pred_fallthru
      _
    // Predicated region
    $region86: #{tpu_custom_call.1} parent=1 // pred_check
      _
    $region87: #{tpu_custom_call.1} parent=1 // pred_check_branch
      %814 = sbr.rel (0) target = $region89
    $region88: #{tpu_custom_call.1} parent=1 // pred_region
      %815 = dma.done [#allocation4], 64
    $region89: #{tpu_custom_call.1} parent=1 // pred_fallthru
      _
    %816 = vsyncpa [#allocation3], 1
    %817 = vsyncpa [#allocation6], 1
    %818 = vsyncpa [#allocation9], 1
    %819 = vsyncpa [#allocation4], 1

</llo_original>
